<compile_context>
chip_gen: v7x
topology: tpu7x:2x2x1
jax: 0.10.0
libtpu: 0.0.40
codegen_flags: <defaults>
</compile_context>

<pallas_src>
import functools

import numpy as np
import jax
import jax.numpy as jnp
from jax.experimental import pallas as pl
from jax.experimental.pallas import tpu as pltpu


def _round_up(x, m):
    return (x + m - 1) // m * m


# ---------------------------------------------------------------------------
# Device-generation heuristics (conservative; safe fallbacks on failure).
# ---------------------------------------------------------------------------
def _tpu_generation_params():
    """Returns (num_tensorcores_per_device, vmem_limit_bytes)."""
    try:
        kind = jax.devices()[0].device_kind.lower()
    except Exception:
        return 1, 32 * 1024 * 1024
    if "v7" in kind or "7x" in kind:
        return 2, 40 * 1024 * 1024            # v7x: 2 TCs/chip, 64 MiB VMEM/TC
    if "lite" in kind or "v5e" in kind or "v6e" in kind:
        return 1, 64 * 1024 * 1024            # v5e/v6e: 1 TC, 128 MiB VMEM
    return 2, 48 * 1024 * 1024                # v4/v5p/unknown: assume megacore


# ---------------------------------------------------------------------------
# pltpu.roll direction probe (one tiny pallas_call, cached).  A silent direction
# flip would corrupt the deconv halo taps, so we probe once defensively.
# ---------------------------------------------------------------------------
_ROLL_MATCHES_NUMPY = None


def _roll_matches_numpy():
    global _ROLL_MATCHES_NUMPY
    if _ROLL_MATCHES_NUMPY is None:
        def probe(x_ref, o_ref):
            o_ref[...] = pltpu.roll(x_ref[...], 1, 1)

        x = jnp.tile(jnp.arange(128, dtype=jnp.float32)[None, :], (8, 1))
        out = pl.pallas_call(
            probe, out_shape=jax.ShapeDtypeStruct((8, 128), jnp.float32))(x)
        # np.roll semantics => element 127 wraps into lane 0.
        _ROLL_MATCHES_NUMPY = bool(float(np.asarray(out)[0, 0]) == 127.0)
    return _ROLL_MATCHES_NUMPY


# ---------------------------------------------------------------------------
# Fused Decoder kernel: one grid step per batch chunk.
# ---------------------------------------------------------------------------
def _decoder_kernel(x_ref, m_ref, w1_ref, b1_ref, w2_ref, b2_ref, w3_ref, b3_ref,
                    o_ref, *, W, cm8, nf8, chunk_p, sparse_stage2, parity_blocks,
                    roll_like_numpy):
    x = x_ref[...]
    if x.ndim == 3:                 # (1, cin, P) per-batch block layout
        x = x[0]
    # x: (cin, chunk_p) bf16

    # ---- stage 1: 1x1 conv (+ folded BN1) + ReLU (bf16 matmul, f32 epilogue) --
    h = jnp.dot(w1_ref[...], x, preferred_element_type=jnp.float32)
    h = jnp.maximum(h + b1_ref[...], 0.0)                    # (cm8, chunk_p) f32

    # ---- stage 2 taps: 4 shifted copies of h feeding the stride-2 deconv ------
    # Halo handled in-register (pltpu.roll + precomputed masks), never in HBM.
    mx, my, mxy = m_ref[0:1, :], m_ref[1:2, :], m_ref[2:3, :]

    def shift_down(arr, d):
        # result[:, p] = arr[:, p + d]; wrapped lanes are zeroed by the masks.
        amount = (chunk_p - d) if roll_like_numpy else d
        return pltpu.roll(arr, amount, 1)

    taps = (h,
            shift_down(h, 1) * mx,            # h[y, x+1]
            shift_down(h, W) * my,            # h[y+1, x]
            shift_down(h, W + 1) * mxy)       # h[y+1, x+1]

    b2 = b2_ref[...]                          # (cm8, 1) f32
    b3 = b3_ref[...]                          # (nf8, 1) f32
    w3 = w3_ref[...]                          # (nf8, cm8) bf16

    def finish_parity(p, d2p_raw):
        # BN2 bias + ReLU, then 1x1 conv (+ folded BN3) + ReLU for parity plane p.
        d2p = jnp.maximum(d2p_raw + b2, 0.0)
        op = jnp.dot(w3, d2p.astype(jnp.bfloat16),
                     preferred_element_type=jnp.float32)
        op = jnp.maximum(op + b3, 0.0)
        o_ref[p * nf8:(p + 1) * nf8, :] = op.astype(o_ref.dtype)

    if sparse_stage2:
        # 9 nonzero (parity, tap) blocks of the transposed conv, accumulated per
        # output parity plane: no zero blocks, no (4*cm8, P) concatenate.
        taps_bf = tuple(t.astype(jnp.bfloat16) for t in taps)
        for p, blist in enumerate(parity_blocks):
            acc = None
            for blk_idx, tap_idx in blist:
                part = jnp.dot(w2_ref[blk_idx], taps_bf[tap_idx],
                               preferred_element_type=jnp.float32)
                acc = part if acc is None else acc + part
            finish_parity(p, acc)
    else:
        # Tiny channel counts: one fused matmul with K = 4*cm8.
        hcat = jnp.concatenate(taps, axis=0).astype(jnp.bfloat16)
        d2 = jnp.dot(w2_ref[...], hcat, preferred_element_type=jnp.float32)
        for p in range(4):
            finish_parity(p, d2[p * cm8:(p + 1) * cm8, :])


def decoder_forward(folded, x_nchw):
    """x: (N, in_ch, H, W) -> (N, n_filters, 2H, 2W); PyTorch Decoder, eval-mode BN."""
    N, cin, H, W = x_nchw.shape
    P = H * W
    nf, nf8, cm8 = folded["n_filters"], folded["nf8"], folded["cm8"]

    num_tc, vmem_limit = _tpu_generation_params()
    # v7x / megacore: keep >= 2 parallel grid steps; single-TC parts: collapse to
    # one step with the whole batch on the lane axis.
    num_chunks = 2 if (num_tc >= 2 and N >= 2 and N % 2 == 0) else 1
    bpc = N // num_chunks                       # batch elements per grid step
    chunk_p = bpc * P
    total_p = N * P

    if bpc == 1:
        # One batch element per grid step: NCHW -> (N, C, H*W) is a pure reshape.
        x_in = x_nchw.reshape(N, cin, P).astype(jnp.bfloat16)
        x_spec = pl.BlockSpec((1, cin, P), lambda g: (g, 0, 0))
    else:
        # Batch folded onto the lane axis: (C, N*H*W).
        x_in = (x_nchw.reshape(N, cin, P).transpose(1, 0, 2)
                .reshape(cin, total_p).astype(jnp.bfloat16))
        x_spec = pl.BlockSpec((cin, chunk_p), lambda g: (0, g))

    # Halo masks, hoisted out of the kernel body (identical for every chunk).
    pos = np.arange(chunk_p, dtype=np.int64)
    mask_x = ((pos % W) < (W - 1)).astype(np.float32)
    mask_y = (((pos // W) % H) < (H - 1)).astype(np.float32)  # % H: no cross-image leak
    masks_np = np.zeros((8, chunk_p), np.float32)
    masks_np[0], masks_np[1], masks_np[2] = mask_x, mask_y, mask_x * mask_y
    masks = jnp.asarray(masks_np)

    kernel = functools.partial(
        _decoder_kernel, W=W, cm8=cm8, nf8=nf8, chunk_p=chunk_p,
        sparse_stage2=folded["sparse_stage2"],
        parity_blocks=folded["parity_blocks"],
        roll_like_numpy=_roll_matches_numpy())

    def const_spec(arr):
        nd = arr.ndim
        return pl.BlockSpec(arr.shape, lambda g, _nd=nd: (0,) * _nd)

    w1, b1 = folded["w1"], folded["b1"]
    w2, b2 = folded["w2"], folded["b2"]
    w3, b3 = folded["w3"], folded["b3"]

    out = pl.pallas_call(
        kernel,
        out_shape=jax.ShapeDtypeStruct((4 * nf8, total_p), jnp.float32),
        grid_spec=pltpu.PrefetchScalarGridSpec(
            num_scalar_prefetch=0,
            grid=(num_chunks,),
            in_specs=[x_spec, const_spec(masks),
                      const_spec(w1), const_spec(b1),
                      const_spec(w2), const_spec(b2),
                      const_spec(w3), const_spec(b3)],
            out_specs=pl.BlockSpec((4 * nf8, chunk_p), lambda g: (0, g)),
        ),
        compiler_params=pltpu.CompilerParams(
            dimension_semantics=("parallel",),
            vmem_limit_bytes=vmem_limit),
    )(x_in, masks, w1, b1, w2, b2, w3, b3)

    # De-interleave the 4 output parity planes -> NCHW.  Kept wrapper-side so the
    # kernel's stores stay lane-dense.  TODO(synk): consume the parity-plane
    # layout directly downstream to save this extra output-sized HBM pass.
    out = out.reshape(2, 2, nf8, N, H, W)
    out = out.transpose(3, 2, 4, 0, 5, 1)[:, :nf]
    return out.reshape(N, nf, 2 * H, 2 * W)


# ---------------------------------------------------------------------------
# Parameter construction / BN folding (host side, one-time).
# ---------------------------------------------------------------------------
def make_decoder_params(key, in_ch, n_filters):
    """Raw PyTorch-layout parameters (Conv2d / ConvTranspose2d / BatchNorm2d, eval)."""
    cmid = in_ch // 4
    keys = jax.random.split(key, 9)

    def uni(k, shape, fan_in):
        b = 1.0 / np.sqrt(fan_in)
        return jax.random.uniform(k, shape, jnp.float32, -b, b)

    def bn(k, c):
        kg, kb, km, kv = jax.random.split(k, 4)
        return (jax.random.uniform(kg, (c,), jnp.float32, 0.5, 1.5),   # gamma
                jax.random.uniform(kb, (c,), jnp.float32, -0.5, 0.5),  # beta
                jax.random.uniform(km, (c,), jnp.float32, -0.5, 0.5),  # running_mean
                jax.random.uniform(kv, (c,), jnp.float32, 0.5, 1.5))   # running_var

    return dict(
        w1=uni(keys[0], (cmid, in_ch, 1, 1), in_ch),      # Conv2d(in_ch, in_ch//4, 1)
        b1=uni(keys[1], (cmid,), in_ch),
        wt=uni(keys[2], (cmid, cmid, 3, 3), cmid * 9),    # ConvTranspose2d weight (Cin, Cout, 3, 3)
        bt=uni(keys[3], (cmid,), cmid * 9),
        w3=uni(keys[4], (n_filters, cmid, 1, 1), cmid),   # Conv2d(in_ch//4, n_filters, 1)
        b3=uni(keys[5], (n_filters,), cmid),
        bn1=bn(keys[6], cmid),
        bn2=bn(keys[7], cmid),
        bn3=bn(keys[8], n_filters),
    )


def _tap_k_index(parity, delta):
    """Transposed-conv kernel index (kh or kw) mapping input offset `delta`
    (= ih - y, in {0,1}) onto output parity `parity`; None if no contribution."""
    if parity == 0:
        return 1 if delta == 0 else None
    return 2 if delta == 0 else 0


def fold_decoder_params(raw, n_filters):
    """Fold eval-mode BN + conv biases into bf16 matmul weights for the kernel."""
    cmid, cin = raw["w1"].shape[0], raw["w1"].shape[1]
    nf = n_filters
    cm8 = _round_up(cmid, 8)          # channel padding -> tile-aligned sublanes
    nf8 = _round_up(nf, 8)
    sparse_stage2 = cm8 >= 128        # per-parity block matmuls at large channel counts

    def scale_bias(bn_params, conv_bias, eps):
        g, b, m, v = bn_params
        s = g / jnp.sqrt(v + eps)
        return (np.asarray(s, np.float32),
                np.asarray(b + (conv_bias - m) * s, np.float32))

    # Stage 1: 1x1 conv + BN1 (eps = 1e-5).
    s1, bb1 = scale_bias(raw["bn1"], raw["b1"], 1e-5)
    w1 = np.zeros((cm8, cin), np.float32)
    w1[:cmid] = s1[:, None] * np.asarray(raw["w1"], np.float32)[:, :, 0, 0]
    b1 = np.zeros((cm8, 1), np.float32)
    b1[:cmid, 0] = bb1

    # Stage 2: transposed conv + BN2.  NOTE: the original module constructs
    # norm2 = nn.BatchNorm2d(in_ch // 4, n_filters, 1), i.e. eps = n_filters and
    # momentum = 1 -- reproduced faithfully (eval mode).
    s2, bb2 = scale_bias(raw["bn2"], raw["bt"], float(n_filters))
    wt = np.asarray(raw["wt"], np.float32)                      # (ci, co, kh, kw)

    blocks, parity_blocks = [], []
    for a in range(2):                                          # output row parity
        for b_ in range(2):                                     # output col parity
            plist = []
            for dy in range(2):                                 # input row offset
                for dx in range(2):                             # input col offset
                    kh = _tap_k_index(a, dy)
                    kw = _tap_k_index(b_, dx)
                    if kh is None or kw is None:
                        continue
                    blk = np.zeros((cm8, cm8), np.float32)
                    blk[:cmid, :cmid] = s2[:, None] * wt[:, :, kh, kw].T  # (co, ci)
                    plist.append((len(blocks), 2 * dy + dx))
                    blocks.append(blk)
            parity_blocks.append(tuple(plist))
    parity_blocks = tuple(parity_blocks)

    if sparse_stage2:
        w2 = np.stack(blocks, axis=0)                           # (9, cm8, cm8)
    else:
        w2 = np.zeros((4 * cm8, 4 * cm8), np.float32)
        for p, plist in enumerate(parity_blocks):
            for bi, ti in plist:
                w2[p * cm8:(p + 1) * cm8, ti * cm8:(ti + 1) * cm8] = blocks[bi]
    b2 = np.zeros((cm8, 1), np.float32)
    b2[:cmid, 0] = bb2

    # Stage 3: 1x1 conv + BN3 (eps = 1e-5).  No kron: one (nf8, cm8) weight shared
    # by all 4 parity planes.
    s3, bb3 = scale_bias(raw["bn3"], raw["b3"], 1e-5)
    w3 = np.zeros((nf8, cm8), np.float32)
    w3[:nf, :cmid] = s3[:, None] * np.asarray(raw["w3"], np.float32)[:, :, 0, 0]
    b3 = np.zeros((nf8, 1), np.float32)
    b3[:nf, 0] = bb3

    return dict(
        w1=jnp.asarray(w1, jnp.bfloat16), b1=jnp.asarray(b1),
        w2=jnp.asarray(w2, jnp.bfloat16), b2=jnp.asarray(b2),
        w3=jnp.asarray(w3, jnp.bfloat16), b3=jnp.asarray(b3),
        n_filters=nf, nf8=nf8, cm8=cm8,
        sparse_stage2=sparse_stage2, parity_blocks=parity_blocks,
    )


# ---------------------------------------------------------------------------
# Pure-JAX reference (high precision, f32) for correctness checking.
# ---------------------------------------------------------------------------
def _reference_forward(raw, x, n_filters):
    prec = jax.lax.Precision.HIGHEST

    def bn(y, p, eps):
        g, b, m, v = p
        inv = (g / jnp.sqrt(v + eps))[None, :, None, None]
        return (y - m[None, :, None, None]) * inv + b[None, :, None, None]

    y = jnp.einsum("oi,nihw->nohw", raw["w1"][:, :, 0, 0], x, precision=prec)
    y = jnp.maximum(bn(y + raw["b1"][None, :, None, None], raw["bn1"], 1e-5), 0.0)

    # ConvTranspose2d(k=3, s=2, p=1, output_padding=1) == lhs-dilated conv with a
    # spatially flipped kernel and asymmetric padding (1, 2) per spatial dim.
    w_conv = jnp.transpose(jnp.flip(raw["wt"], (2, 3)), (1, 0, 2, 3))   # OIHW
    y = jax.lax.conv_general_dilated(
        y, w_conv, window_strides=(1, 1), padding=((1, 2), (1, 2)),
        lhs_dilation=(2, 2), rhs_dilation=(1, 1),
        dimension_numbers=("NCHW", "OIHW", "NCHW"), precision=prec)
    y = jnp.maximum(bn(y + raw["bt"][None, :, None, None], raw["bn2"],
                       float(n_filters)), 0.0)

    y = jnp.einsum("oi,nihw->nohw", raw["w3"][:, :, 0, 0], y, precision=prec)
    y = jnp.maximum(bn(y + raw["b3"][None, :, None, None], raw["bn3"], 1e-5), 0.0)
    return y


def _check(name, out, ref):
    out, ref = np.asarray(out), np.asarray(ref)
    assert out.shape == ref.shape, (name, out.shape, ref.shape)
    # bf16 matmul operands (f32 accumulation) -> loosened tolerance vs f32 reference.
    assert np.allclose(out, ref, atol=5e-2, rtol=5e-2), (
        f"Pallas Decoder mismatch ({name}); max abs err = "
        f"{float(np.max(np.abs(out - ref)))}")


if __name__ == "__main__":
    key = jax.random.PRNGKey(0)
    k1, k2, k3, k4 = jax.random.split(key, 4)

    # Config 1: small shape -> fused (K = 4*cm8) stage-2 path.
    N, in_ch, Himg, Wimg, nf = 2, 16, 16, 16, 8
    x = jax.random.normal(k1, (N, in_ch, Himg, Wimg), jnp.float32)
    raw = make_decoder_params(k2, in_ch, nf)
    folded = fold_decoder_params(raw, nf)
    out = jax.block_until_ready(decoder_forward(folded, x))
    ref = jax.block_until_ready(_reference_forward(raw, x, nf))
    assert out.shape == (N, nf, 2 * Himg, 2 * Wimg), out.shape
    _check("small", out, ref)

    # Config 2: large channel count -> sparse per-parity stage-2 path (cm8 = 128).
    N2, in_ch2, H2, W2, nf2 = 1, 512, 16, 16, 32
    x2 = jax.random.normal(k3, (N2, in_ch2, H2, W2), jnp.float32)
    raw2 = make_decoder_params(k4, in_ch2, nf2)
    folded2 = fold_decoder_params(raw2, nf2)
    out2 = jax.block_until_ready(decoder_forward(folded2, x2))
    ref2 = jax.block_until_ready(_reference_forward(raw2, x2, nf2))
    assert out2.shape == (N2, nf2, 2 * H2, 2 * W2), out2.shape
    _check("large", out2, ref2)

    print("KERNEL_OK")
</pallas_src>

<mosaic_0001>
module attributes {stable_mosaic.version = 11 : i64} {
  func.func @probe(%arg0: memref<8x128xf32, #tpu.memory_space<vmem>>, %arg1: memref<8x128xf32, #tpu.memory_space<vmem>>) attributes {dimension_semantics = [], scalar_prefetch = 0 : i64, scratch_operands = 0 : i64, tpu.core_type = #tpu.core_type<tc>} {
    %c0 = arith.constant 0 : index
    %c0_0 = arith.constant 0 : index
    %0 = vector.load %arg0[%c0, %c0_0] : memref<8x128xf32, #tpu.memory_space<vmem>>, vector<8x128xf32>
    %c1_i32 = arith.constant 1 : i32
    %1 = tpu.dynamic_rotate %0 by %c1_i32 dim 1 : vector<8x128xf32>, i32 -> vector<8x128xf32>
    %c0_1 = arith.constant 0 : index
    %c0_2 = arith.constant 0 : index
    %2 = vector.load %arg1[%c0_1, %c0_2] : memref<8x128xf32, #tpu.memory_space<vmem>>, vector<8x128xf32>
    tpu.vector_store %arg1[%c0_1, %c0_2], %1 {strides = array<i32>} : memref<8x128xf32, #tpu.memory_space<vmem>>, vector<8x128xf32>,
    return
  }
}

</mosaic_0001>

<llo_original>
// kernel: tpu_custom_call.1
$region0: #{tpu_custom_call.1}
  #allocation0 [shape = 'u32[]', space=smem, size = 0x4, offset = 0x4, fixed_abs, tag = 'smem constant byte address 0x4 - core index']
  #allocation1 [shape = 'u32[144,128]{1,0:T(1,128)}', space=vmem, size = 0x12000, scoped, tag = 'internal scratch']
  %s0 = inlined_call_operand.hbm [shape: f32[8,128], index: 0, kind: input, shape index: {}]
  %s1 = inlined_call_operand.hbm [shape: f32[8,128], index: 1, kind: output, shape index: {}]
  %s2 = sld [smem:[#allocation0]]
  $region18: #{tpu_custom_call.1} parent=0
    _
  %s4 = ssub.s32 1, %s2
  %s5 = scalar_select 0, %s4, %s2
  $region1: #{tpu_custom_call.1} parent=0
    #allocation2 [shape = 'u8[4096]{0}', space=vmem, size = 0x1000, scoped, tag = 'input window, operand 0, single buffered']
    #allocation3 [shape = 's32[1]{0}', space=sflag, size = 0x4, scoped, tag = 'scoped memory for tpu_custom_call.1']
    #allocation4 [shape = 's32[1]{0}', space=sflag, size = 0x4, scoped, tag = 'scoped memory for tpu_custom_call.1']
    #allocation5 [shape = 'u8[4096]{0}', space=vmem, size = 0x1000, scoped, tag = 'output window, operand 0, single buffered']
    %6 = vsyncpa [#allocation3], 0
    %7 = vsyncpa [#allocation4], 0
    // Predicated region
    $region2: #{tpu_custom_call.1} parent=1 // pred_check
      _
    $region3: #{tpu_custom_call.1} parent=1 // pred_check_branch
      %9 = sbr.rel (0) target = $region5
    $region4: #{tpu_custom_call.1} parent=1 // pred_region
      %s11 = ssub.s32 128, 128
      %12 = vsyncadd [#allocation3], %s11
      %s14 = sshll.u32 [#allocation2], 4
      %s15 = int_to_ptr.vmem [resolvable:$true] %s14
      %17 = dma.hbm_to_vmem [thread:$0]  %s0, 128, %s15, [#allocation3]
    $region5: #{tpu_custom_call.1} parent=1 // pred_fallthru
      _
    // Predicated region
    $region6: #{tpu_custom_call.1} parent=1 // pred_check
      _
    $region7: #{tpu_custom_call.1} parent=1 // pred_check_branch
      %19 = sbr.rel (0) target = $region9
    $region8: #{tpu_custom_call.1} parent=1 // pred_region
      %20 = dma.done [#allocation3], 128
    $region9: #{tpu_custom_call.1} parent=1 // pred_fallthru
      _
    %v21 = vld [vmem:[#allocation2] sm:$0xff]
    %22 = vrot.lane.b32.xlu0 %v21, 1
    %v23 = vpop.permute.xlu0 %22
    %24 = vst [vmem:[#allocation5] sm:$0xff] %v23
    // Predicated region
    $region10: #{tpu_custom_call.1} parent=1 // pred_check
      _
    $region11: #{tpu_custom_call.1} parent=1 // pred_check_branch
      %26 = sbr.rel (0) target = $region13
    $region12: #{tpu_custom_call.1} parent=1 // pred_region
      %s28 = ssub.s32 128, 128
      %29 = vsyncadd [#allocation4], %s28
      %s31 = sshll.u32 [#allocation5], 4
      %s32 = int_to_ptr.vmem [resolvable:$true] %s31
      %34 = dma.vmem_to_hbm [thread:$0]  %s32, 128, %s1, [#allocation4]
    $region13: #{tpu_custom_call.1} parent=1 // pred_fallthru
      _
    // Predicated region
    $region14: #{tpu_custom_call.1} parent=1 // pred_check
      _
    $region15: #{tpu_custom_call.1} parent=1 // pred_check_branch
      %36 = sbr.rel (0) target = $region17
    $region16: #{tpu_custom_call.1} parent=1 // pred_region
      %37 = dma.done [#allocation4], 128
    $region17: #{tpu_custom_call.1} parent=1 // pred_fallthru
      _
    %38 = vsyncpa [#allocation3], 1
    %39 = vsyncpa [#allocation4], 1

</llo_original>
